<compile_context>
chip_gen: v6e
topology: v6e:2x2x1
jax: 0.10.0
libtpu: 0.0.40
codegen_flags: <defaults>
</compile_context>

<pallas_src>
import functools

import jax
import jax.numpy as jnp
from jax.experimental import pallas as pl
from jax.experimental.pallas import tpu as pltpu


# --------------------------------------------------------------------------- #
# Kernel: one MXU matmul + f32 epilogue.                                      #
# --------------------------------------------------------------------------- #
def _conv_lrelu_kernel(x_ref, t_ref, b_ref, o_ref, *, negative_slope):
    # x_ref : (rows, K*W*C_in_p)   im2col'd input rows (compute dtype)
    # t_ref : (K*W*C_in_p, W*C_out) merged block-Toeplitz weights
    # b_ref : (1, W*C_out)          bias tiled over W (f32)
    # o_ref : (rows, W*C_out)       lane-dense output rows
    acc = jnp.dot(x_ref[...], t_ref[...], preferred_element_type=jnp.float32)
    acc = acc + b_ref[...]
    # LeakyReLU as maximum(x, a*x): valid for 0 <= negative_slope <= 1.
    o_ref[...] = jnp.maximum(acc, negative_slope * acc).astype(o_ref.dtype)


# --------------------------------------------------------------------------- #
# Helpers                                                                     #
# --------------------------------------------------------------------------- #
def _padded_in_channels(W, C_in):
    """Zero-pad C_in so W*C_in_p is a multiple of 128 (lane-dense LHS) when
    the overhead is modest; the extra zero MACs are free on the MXU."""
    if (W * C_in) % 128 == 0:
        return C_in
    if 128 % W == 0:
        unit = 128 // W
        cp = ((C_in + unit - 1) // unit) * unit
        if cp <= max(8, 2 * C_in):
            return cp
    return C_in


def _num_tensorcores_per_chip():
    """v7x has 2 TensorCores per chip; v5e/v6e have 1.  Only used to pick the
    batch blocking (per-core sample on v7x vs. whole batch in one grid step)."""
    try:
        kind = jax.devices()[0].device_kind.lower()
        if "v7" in kind:
            return 2
    except Exception:
        pass
    return 1


# --------------------------------------------------------------------------- #
# Weight preprocessing (hoist out of the per-call path / reuse across calls). #
# --------------------------------------------------------------------------- #
def prepare_conv_lrelu_params(weight, bias, *, width, compute_dtype=jnp.bfloat16):
    """Build the merged block-Toeplitz weight T2 and the tiled bias row.

    T2[(kh*W + wi)*C_in_p + ci, wo*C_out + co] = weight[co, ci, kh, wi - wo + pad]
    (zero when wi - wo + pad is outside [0, K) -> horizontal zero padding).
    """
    C_out, C_in, K, K2 = weight.shape
    assert K == K2, "square kernels only"
    pad = (K - 1) // 2
    W = width
    C_in_p = _padded_in_channels(W, C_in)

    w_kkio = jnp.transpose(weight, (2, 3, 1, 0)).astype(jnp.float32)  # (Kh,Kw,Ci,Co)
    if C_in_p > C_in:
        w_kkio = jnp.pad(w_kkio, ((0, 0), (0, 0), (0, C_in_p - C_in), (0, 0)))

    kw = jnp.arange(K)[:, None, None]                       # kernel-w tap
    wi = jnp.arange(W)[None, :, None]                       # input column
    wo = jnp.arange(W)[None, None, :]                       # output column
    onehot = (wi - wo + pad == kw).astype(jnp.float32)      # (Kw, Wi, Wo)
    T = jnp.einsum('kpw,hkio->hpiwo', onehot, w_kkio)       # (Kh, Wi, Ci_p, Wo, Co)
    T2 = T.reshape(K * W * C_in_p, W * C_out).astype(compute_dtype)

    b_row = jnp.tile(bias.astype(jnp.float32), W).reshape(1, W * C_out)
    return T2, b_row


# --------------------------------------------------------------------------- #
# Per-call apply                                                              #
# --------------------------------------------------------------------------- #
def conv_lrelu_apply(x_nchw, T2, b_row, *, kernel_size=3, negative_slope=0.1,
                     compute_dtype=jnp.bfloat16, batch_block=None):
    assert 0.0 <= negative_slope <= 1.0, "maximum-form LeakyReLU needs slope in [0,1]"
    N, C_in, H, W = x_nchw.shape
    K = kernel_size
    pad = (K - 1) // 2
    C_in_p = _padded_in_channels(W, C_in)
    D_in = K * W * C_in_p
    D_out = T2.shape[1]
    C_out = D_out // W
    assert T2.shape[0] == D_in, "T2 does not match input geometry"

    # Wrapper-side prologue: NCHW -> (N,H,W,Ci), channel pad, cast to compute
    # dtype (halves the DMA bytes on the bf16 path), vertical halo + kh shift
    # (im2col over kh).  Nothing is left for the kernel but the matmul.
    x_nhwc = jnp.transpose(x_nchw, (0, 2, 3, 1))
    if C_in_p > C_in:
        x_nhwc = jnp.pad(x_nhwc, ((0, 0), (0, 0), (0, 0), (0, C_in_p - C_in)))
    x_rows = x_nhwc.reshape(N, H, W * C_in_p).astype(compute_dtype)
    x_vpad = jnp.pad(x_rows, ((0, 0), (pad, pad), (0, 0)))        # vertical halo
    x_cols = jnp.concatenate([x_vpad[:, kh:kh + H, :] for kh in range(K)],
                             axis=-1)                              # (N, H, K*W*Ci_p)
    x_flat = x_cols.reshape(N * H, D_in)

    # Batch blocking: whole batch in one step on single-TC chips (v5e/v6e),
    # one sample per TensorCore on v7x (2-step "parallel" grid).
    if batch_block is None:
        ntc = _num_tensorcores_per_chip()
        batch_block = N // ntc if (ntc > 1 and N % ntc == 0 and N > 1) else N
    if N % batch_block != 0 or (batch_block * H) % 8 != 0:
        batch_block = N
    rows = batch_block * H
    grid = (N // batch_block,)

    out_flat = pl.pallas_call(
        functools.partial(_conv_lrelu_kernel, negative_slope=negative_slope),
        out_shape=jax.ShapeDtypeStruct((N * H, D_out), x_nchw.dtype),
        grid_spec=pltpu.PrefetchScalarGridSpec(
            num_scalar_prefetch=0,
            grid=grid,
            in_specs=[
                pl.BlockSpec((rows, D_in), lambda n: (n, 0)),
                pl.BlockSpec((D_in, D_out), lambda n: (0, 0)),
                pl.BlockSpec((1, D_out), lambda n: (0, 0)),
            ],
            out_specs=pl.BlockSpec((rows, D_out), lambda n: (n, 0)),
        ),
        compiler_params=pltpu.CompilerParams(
            dimension_semantics=("parallel",),
            # Let XLA fuse the transpose / im2col chain into the input DMA.
            allow_input_fusion=[True, False, False],
            vmem_limit_bytes=32 * 1024 * 1024),
    )(x_flat, T2, b_row)

    # (N*H, W*C_out) -> (N, H, W, C_out) (free) -> NCHW to match PyTorch.
    return jnp.transpose(out_flat.reshape(N, H, W, C_out), (0, 3, 1, 2))


def conv_lrelu(x_nchw, weight, bias, *, kernel_size=3, negative_slope=0.1,
               compute_dtype=jnp.bfloat16, batch_block=None):
    """x_nchw: (N, C_in, H, W); weight: (C_out, C_in, K, K); bias: (C_out,)."""
    if kernel_size % 2 != 1:
        raise NotImplementedError("only odd kernel_size matches SAME padding")
    T2, b_row = prepare_conv_lrelu_params(
        weight, bias, width=x_nchw.shape[-1], compute_dtype=compute_dtype)
    return conv_lrelu_apply(x_nchw, T2, b_row, kernel_size=kernel_size,
                            negative_slope=negative_slope,
                            compute_dtype=compute_dtype,
                            batch_block=batch_block)


# --------------------------------------------------------------------------- #
# Reference + test                                                            #
# --------------------------------------------------------------------------- #
def _reference(x_nchw, weight, bias, negative_slope=0.1):
    y = jax.lax.conv_general_dilated(
        x_nchw, weight, window_strides=(1, 1), padding="SAME",
        dimension_numbers=("NCHW", "OIHW", "NCHW"))
    y = y + bias.reshape(1, -1, 1, 1)
    return jnp.where(y > 0, y, negative_slope * y)


if __name__ == "__main__":
    # Small shapes consistent with the module: batch=2, in_ch=4, out_ch=8, 16x16.
    N, C_in, C_out, H, W, K = 2, 4, 8, 16, 16, 3

    key = jax.random.PRNGKey(0)
    kx, kw_, kb = jax.random.split(key, 3)

    x = jax.random.normal(kx, (N, C_in, H, W), dtype=jnp.float32)

    # Init mimicking PyTorch Conv2d default (uniform in +/- 1/sqrt(fan_in)).
    fan_in = C_in * K * K
    bound = 1.0 / (fan_in ** 0.5)
    weight = jax.random.uniform(kw_, (C_out, C_in, K, K), jnp.float32,
                                minval=-bound, maxval=bound)
    bias = jax.random.uniform(kb, (C_out,), jnp.float32,
                              minval=-bound, maxval=bound)

    ref = _reference(x, weight, bias)

    # Exact-math check with f32 MXU inputs.
    out_f32 = jax.block_until_ready(
        conv_lrelu(x, weight, bias, kernel_size=K, compute_dtype=jnp.float32))
    assert out_f32.shape == (N, C_out, H, W)
    assert jnp.allclose(out_f32, ref, atol=1e-3, rtol=1e-3), "f32 mismatch"

    # Default fast path: bf16 MXU inputs, f32 accumulation + epilogue.
    out_bf16 = jax.block_until_ready(
        conv_lrelu(x, weight, bias, kernel_size=K, compute_dtype=jnp.bfloat16))
    assert out_bf16.shape == (N, C_out, H, W)
    assert jnp.allclose(out_bf16, ref, atol=2e-2, rtol=2e-2), "bf16 mismatch"

    print("KERNEL_OK")
</pallas_src>

<mosaic_0001>
module attributes {stable_mosaic.version = 11 : i64} {
  func.func @_conv_lrelu_kernel(%arg0: i32, %arg1: memref<32x384xf32, #tpu.memory_space<vmem>>, %arg2: memref<384x128xf32, #tpu.memory_space<vmem>>, %arg3: memref<1x128xf32, #tpu.memory_space<vmem>>, %arg4: memref<32x128xf32, #tpu.memory_space<vmem>>) attributes {dimension_semantics = [#tpu.dimension_semantics<parallel>], iteration_bounds = array<i64: 1>, scalar_prefetch = 0 : i64, scratch_operands = 0 : i64, tpu.core_type = #tpu.core_type<tc>, window_params = [{transform_indices = @transform_0, window_bounds = array<i64: 32, 384>}, {pipeline_mode = #tpu.pipeline_mode<synchronous>, transform_indices = @transform_1, window_bounds = array<i64: 384, 128>}, {pipeline_mode = #tpu.pipeline_mode<synchronous>, transform_indices = @transform_2, window_bounds = array<i64: 1, 128>}, {transform_indices = @transform_3, window_bounds = array<i64: 32, 128>}]} {
    %c0 = arith.constant 0 : index
    %c0_0 = arith.constant 0 : index
    %0 = vector.load %arg1[%c0, %c0_0] : memref<32x384xf32, #tpu.memory_space<vmem>>, vector<32x384xf32>
    %c0_1 = arith.constant 0 : index
    %c0_2 = arith.constant 0 : index
    %1 = vector.load %arg2[%c0_1, %c0_2] : memref<384x128xf32, #tpu.memory_space<vmem>>, vector<384x128xf32>
    %cst = arith.constant dense<0.000000e+00> : vector<32x128xf32>
    %2 = tpu.matmul %0, %1, %cst {dimension_numbers = #tpu.dot_dimension_numbers<[1], [0], [0], [1], [0, 0, 1, 1], [], []>} : vector<32x384xf32>, vector<384x128xf32>, vector<32x128xf32> -> vector<32x128xf32>
    %c0_3 = arith.constant 0 : index
    %c0_4 = arith.constant 0 : index
    %3 = vector.load %arg3[%c0_3, %c0_4] : memref<1x128xf32, #tpu.memory_space<vmem>>, vector<1x128xf32>
    %4 = vector.broadcast %3 : vector<1x128xf32> to vector<32x128xf32>
    %5 = arith.addf %2, %4 : vector<32x128xf32>
    %cst_5 = arith.constant 1.000000e-01 : f32
    %6 = vector.broadcast %cst_5 : f32 to vector<32x128xf32>
    %7 = arith.mulf %6, %5 : vector<32x128xf32>
    %8 = arith.maximumf %5, %7 : vector<32x128xf32>
    %c0_6 = arith.constant 0 : index
    %c0_7 = arith.constant 0 : index
    %9 = vector.load %arg4[%c0_6, %c0_7] : memref<32x128xf32, #tpu.memory_space<vmem>>, vector<32x128xf32>
    tpu.vector_store %arg4[%c0_6, %c0_7], %8 {strides = array<i32>} : memref<32x128xf32, #tpu.memory_space<vmem>>, vector<32x128xf32>,
    return
  }
  func.func @transform_0(%arg0: i32) -> (i32, i32) {
    %c0_i32 = arith.constant 0 : i32
    %c0_i32_0 = arith.constant 0 : i32
    return %arg0, %c0_i32 : i32, i32
  }
  func.func @transform_1(%arg0: i32) -> (i32, i32) {
    %c0_i32 = arith.constant 0 : i32
    %c0_i32_0 = arith.constant 0 : i32
    %c0_i32_1 = arith.constant 0 : i32
    return %c0_i32, %c0_i32_0 : i32, i32
  }
  func.func @transform_2(%arg0: i32) -> (i32, i32) {
    %c0_i32 = arith.constant 0 : i32
    %c0_i32_0 = arith.constant 0 : i32
    %c0_i32_1 = arith.constant 0 : i32
    return %c0_i32, %c0_i32_0 : i32, i32
  }
  func.func @transform_3(%arg0: i32) -> (i32, i32) {
    %c0_i32 = arith.constant 0 : i32
    %c0_i32_0 = arith.constant 0 : i32
    return %arg0, %c0_i32 : i32, i32
  }
}

</mosaic_0001>

<llo_original>
// kernel: tpu_custom_call.1
$region0: #{tpu_custom_call.1}
  #allocation0 [shape = 'u32[]', space=smem, size = 0x4, offset = 0x4, fixed_abs, tag = 'smem constant byte address 0x4 - core index']
  #allocation1 [shape = 'u32[144,128]{1,0:T(1,128)}', space=vmem, size = 0x12000, scoped, tag = 'internal scratch']
  %s0 = inlined_call_operand.hbm [shape: f32[32,384], index: 0, kind: input, shape index: {}]
  %s1 = inlined_call_operand.hbm [shape: f32[384,128], index: 1, kind: input, shape index: {}]
  %s2 = inlined_call_operand.vmem [shape: f32[1,128], index: 2, kind: input, shape index: {}]
  %s3 = inlined_call_operand.hbm [shape: f32[32,128], index: 3, kind: output, shape index: {}]
  %s4 = sld [smem:[#allocation0]]
  $region30: #{tpu_custom_call.1} parent=0
    _
  %s6 = ssub.s32 1, %s4
  %s7 = scalar_select 0, %s6, %s4
  $region1: #{tpu_custom_call.1} parent=0
    #allocation2 [shape = 'u8[49152]{0}', space=vmem, size = 0xc000, scoped, tag = 'input window, operand 0, single buffered']
    #allocation3 [shape = 's32[1]{0}', space=sflag, size = 0x4, scoped, tag = 'scoped memory for tpu_custom_call.1']
    #allocation4 [shape = 's32[1]{0}', space=sflag, size = 0x4, scoped, tag = 'scoped memory for tpu_custom_call.1']
    #allocation5 [shape = 'u8[196608]{0}', space=vmem, size = 0x30000, scoped, tag = 'input window, operand 1, single buffered']
    #allocation6 [shape = 's32[1]{0}', space=sflag, size = 0x4, scoped, tag = 'scoped memory for tpu_custom_call.1']
    #allocation7 [shape = 'u8[16384]{0}', space=vmem, size = 0x4000, scoped, tag = 'output window, operand 0, single buffered']
    %8 = vsyncpa [#allocation3], 0
    %9 = vsyncpa [#allocation6], 0
    %10 = vsyncpa [#allocation4], 0
    // Predicated region
    $region2: #{tpu_custom_call.1} parent=1 // pred_check
      _
    $region3: #{tpu_custom_call.1} parent=1 // pred_check_branch
      %12 = sbr.rel (0) target = $region5
    $region4: #{tpu_custom_call.1} parent=1 // pred_region
      %s14 = ssub.s32 1536, 1536
      %15 = vsyncadd [#allocation3], %s14
      %s16 = sshll.u32 [#allocation2], 4
      %s17 = int_to_ptr.vmem [resolvable:$true] %s16
      %22 = dma.hbm_to_vmem [thread:$0]  %s0, 1536, %s17, [#allocation3], 384, 384, 24
    $region5: #{tpu_custom_call.1} parent=1 // pred_fallthru
      _
    // Predicated region
    $region6: #{tpu_custom_call.1} parent=1 // pred_check
      _
    $region7: #{tpu_custom_call.1} parent=1 // pred_check_branch
      %24 = sbr.rel (0) target = $region9
    $region8: #{tpu_custom_call.1} parent=1 // pred_region
      %s26 = ssub.s32 6144, 6144
      %27 = vsyncadd [#allocation6], %s26
      %s28 = sshll.u32 [#allocation5], 4
      %s29 = int_to_ptr.vmem [resolvable:$true] %s28
      %34 = dma.hbm_to_vmem [thread:$0]  %s1, 6144, %s29, [#allocation6], 128, 128, 8
    $region9: #{tpu_custom_call.1} parent=1 // pred_fallthru
      _
    // Predicated region
    $region10: #{tpu_custom_call.1} parent=1 // pred_check
      _
    $region11: #{tpu_custom_call.1} parent=1 // pred_check_branch
      %36 = sbr.rel (0) target = $region13
    $region12: #{tpu_custom_call.1} parent=1 // pred_region
      _
    $region13: #{tpu_custom_call.1} parent=1 // pred_fallthru
      _
    // Predicated region
    $region14: #{tpu_custom_call.1} parent=1 // pred_check
      _
    $region15: #{tpu_custom_call.1} parent=1 // pred_check_branch
      %38 = sbr.rel (0) target = $region17
    $region16: #{tpu_custom_call.1} parent=1 // pred_region
      %39 = dma.done [#allocation3], 1536
    $region17: #{tpu_custom_call.1} parent=1 // pred_fallthru
      _
    // Predicated region
    $region18: #{tpu_custom_call.1} parent=1 // pred_check
      _
    $region19: #{tpu_custom_call.1} parent=1 // pred_check_branch
      %41 = sbr.rel (0) target = $region21
    $region20: #{tpu_custom_call.1} parent=1 // pred_region
      %42 = dma.done [#allocation6], 6144
    $region21: #{tpu_custom_call.1} parent=1 // pred_fallthru
      _
    %v43 = vld [vmem:[#allocation2] sm:$0xff]
    %v44 = vld [vmem:[#allocation2 + $0x8] sm:$0xff]
    %v45 = vld [vmem:[#allocation2 + $0x10] sm:$0xff]
    %v46 = vld [vmem:[#allocation2 + $0x18] sm:$0xff]
    %v47 = vld [vmem:[#allocation2 + $0x20] sm:$0xff]
    %v48 = vld [vmem:[#allocation2 + $0x28] sm:$0xff]
    %v49 = vld [vmem:[#allocation2 + $0x30] sm:$0xff]
    %v50 = vld [vmem:[#allocation2 + $0x38] sm:$0xff]
    %v51 = vld [vmem:[#allocation2 + $0x40] sm:$0xff]
    %v52 = vld [vmem:[#allocation2 + $0x48] sm:$0xff]
    %v53 = vld [vmem:[#allocation2 + $0x50] sm:$0xff]
    %v54 = vld [vmem:[#allocation2 + $0x58] sm:$0xff]
    %v55 = vld [vmem:[#allocation5] sm:$0xff]
    %v56 = vld [vmem:[#allocation5 + $0x8] sm:$0xff]
    %v57 = vld [vmem:[#allocation5 + $0x10] sm:$0xff]
    %v58 = vld [vmem:[#allocation5 + $0x18] sm:$0xff]
    %v59 = vld [vmem:[#allocation5 + $0x20] sm:$0xff]
    %v60 = vld [vmem:[#allocation5 + $0x28] sm:$0xff]
    %v61 = vld [vmem:[#allocation5 + $0x30] sm:$0xff]
    %v62 = vld [vmem:[#allocation5 + $0x38] sm:$0xff]
    %v63 = vld [vmem:[#allocation5 + $0x40] sm:$0xff]
    %v64 = vld [vmem:[#allocation5 + $0x48] sm:$0xff]
    %v65 = vld [vmem:[#allocation5 + $0x50] sm:$0xff]
    %v66 = vld [vmem:[#allocation5 + $0x58] sm:$0xff]
    %v67 = vld [vmem:[#allocation5 + $0x60] sm:$0xff]
    %v68 = vld [vmem:[#allocation5 + $0x68] sm:$0xff]
    %v69 = vld [vmem:[#allocation5 + $0x70] sm:$0xff]
    %v70 = vld [vmem:[#allocation5 + $0x78] sm:$0xff]
    %v71 = vld [vmem:[#allocation5 + $0x80] sm:$0xff]
    %v72 = vld [vmem:[#allocation5 + $0x88] sm:$0xff]
    %v73 = vld [vmem:[#allocation5 + $0x90] sm:$0xff]
    %v74 = vld [vmem:[#allocation5 + $0x98] sm:$0xff]
    %v75 = vld [vmem:[#allocation5 + $0xa0] sm:$0xff]
    %v76 = vld [vmem:[#allocation5 + $0xa8] sm:$0xff]
    %v77 = vld [vmem:[#allocation5 + $0xb0] sm:$0xff]
    %v78 = vld [vmem:[#allocation5 + $0xb8] sm:$0xff]
    %v79 = vld [vmem:[#allocation5 + $0xc0] sm:$0xff]
    %v80 = vld [vmem:[#allocation5 + $0xc8] sm:$0xff]
    %v81 = vld [vmem:[#allocation5 + $0xd0] sm:$0xff]
    %v82 = vld [vmem:[#allocation5 + $0xd8] sm:$0xff]
    %v83 = vld [vmem:[#allocation5 + $0xe0] sm:$0xff]
    %v84 = vld [vmem:[#allocation5 + $0xe8] sm:$0xff]
    %v85 = vld [vmem:[#allocation5 + $0xf0] sm:$0xff]
    %v86 = vld [vmem:[#allocation5 + $0xf8] sm:$0xff]
    %v87 = vld [vmem:[#allocation5 + $0x100] sm:$0xff]
    %v88 = vld [vmem:[#allocation5 + $0x108] sm:$0xff]
    %v89 = vld [vmem:[#allocation5 + $0x110] sm:$0xff]
    %v90 = vld [vmem:[#allocation5 + $0x118] sm:$0xff]
    %v91 = vld [vmem:[#allocation5 + $0x120] sm:$0xff]
    %v92 = vld [vmem:[#allocation5 + $0x128] sm:$0xff]
    %v93 = vld [vmem:[#allocation5 + $0x130] sm:$0xff]
    %v94 = vld [vmem:[#allocation5 + $0x138] sm:$0xff]
    %v95 = vld [vmem:[#allocation5 + $0x140] sm:$0xff]
    %v96 = vld [vmem:[#allocation5 + $0x148] sm:$0xff]
    %v97 = vld [vmem:[#allocation5 + $0x150] sm:$0xff]
    %v98 = vld [vmem:[#allocation5 + $0x158] sm:$0xff]
    %v99 = vld [vmem:[#allocation5 + $0x160] sm:$0xff]
    %v100 = vld [vmem:[#allocation5 + $0x168] sm:$0xff]
    %v101 = vld [vmem:[#allocation5 + $0x170] sm:$0xff]
    %v102 = vld [vmem:[#allocation5 + $0x178] sm:$0xff]
    %v103 = vld [vmem:[%s2] sm:$0x1]
    %v105 = vlaneseq
    %v106 = vshrl.u32 %v105, 7
    %v107 = vsub.s32 0, %v106
    %v108 = vrot.slane %v103, %v107
    %110 = vmatprep.subr.mxu0 0.0
    %111 = vmatpush1.msra.mxu0 %v70
    %112 = vmatprep.subr.mxu0 0.0
    %113 = vmatpush1.msra.mxu0 %v69
    %114 = vmatprep.subr.mxu0 0.0
    %115 = vmatpush1.msra.mxu0 %v68
    %116 = vmatprep.subr.mxu0 0.0
    %117 = vmatpush1.msra.mxu0 %v67
    %118 = vmatprep.subr.mxu0 0.0
    %119 = vmatpush1.msra.mxu0 %v66
    %120 = vmatprep.subr.mxu0 0.0
    %121 = vmatpush1.msra.mxu0 %v65
    %122 = vmatprep.subr.mxu0 0.0
    %123 = vmatpush1.msra.mxu0 %v64
    %124 = vmatprep.subr.mxu0 0.0
    %125 = vmatpush1.msra.mxu0 %v63
    %126 = vmatprep.subr.mxu0 0.0
    %127 = vmatpush1.msra.mxu0 %v62
    %128 = vmatprep.subr.mxu0 0.0
    %129 = vmatpush1.msra.mxu0 %v61
    %130 = vmatprep.subr.mxu0 0.0
    %131 = vmatpush1.msra.mxu0 %v60
    %132 = vmatprep.subr.mxu0 0.0
    %133 = vmatpush1.msra.mxu0 %v59
    %134 = vmatprep.subr.mxu0 0.0
    %135 = vmatpush1.msra.mxu0 %v58
    %136 = vmatprep.subr.mxu0 0.0
    %137 = vmatpush1.msra.mxu0 %v57
    %138 = vmatprep.subr.mxu0 0.0
    %139 = vmatpush1.msra.mxu0 %v56
    %140 = vmatprep.subr.mxu0 0.0
    %141 = vmatpush1.msra.mxu0 %v55
    %142 = vmatprep.subr.mxu0 0.0
    %143 = vmatpush2.msra.mxu0 %v86
    %144 = vmatprep.subr.mxu0 0.0
    %145 = vmatpush2.msra.mxu0 %v85
    %146 = vmatprep.subr.mxu0 0.0
    %147 = vmatpush2.msra.mxu0 %v84
    %148 = vmatprep.subr.mxu0 0.0
    %149 = vmatpush2.msra.mxu0 %v83
    %150 = vmatprep.subr.mxu0 0.0
    %151 = vmatpush2.msra.mxu0 %v82
    %152 = vmatprep.subr.mxu0 0.0
    %153 = vmatpush2.msra.mxu0 %v81
    %154 = vmatprep.subr.mxu0 0.0
    %155 = vmatpush2.msra.mxu0 %v80
    %156 = vmatprep.subr.mxu0 0.0
    %157 = vmatpush2.msra.mxu0 %v79
    %158 = vmatprep.subr.mxu0 0.0
    %159 = vmatpush2.msra.mxu0 %v78
    %160 = vmatprep.subr.mxu0 0.0
    %161 = vmatpush2.msra.mxu0 %v77
    %162 = vmatprep.subr.mxu0 0.0
    %163 = vmatpush2.msra.mxu0 %v76
    %164 = vmatprep.subr.mxu0 0.0
    %165 = vmatpush2.msra.mxu0 %v75
    %166 = vmatprep.subr.mxu0 0.0
    %167 = vmatpush2.msra.mxu0 %v74
    %168 = vmatprep.subr.mxu0 0.0
    %169 = vmatpush2.msra.mxu0 %v73
    %170 = vmatprep.subr.mxu0 0.0
    %171 = vmatpush2.msra.mxu0 %v72
    %172 = vmatprep.subr.mxu0 0.0
    %173 = vmatpush2.msra.mxu0 %v71
    %174 = vmatprep.mubr.f32.mxu0 %v44
    %175 = vmatmul.mubr.f32.gmra.mxu0 %v43
    %v176 = vpop.f32.mrf.mxu0
    %v177 = vadd.f32 %v108, %v176
    %v178 = vpop.f32.mrf.mxu0
    %179 = vmatprep.mubr.f32.mxu0 %v47
    %180 = vmatmul.mubr.f32.gmra.mxu0 %v46
    %v181 = vpop.f32.mrf.mxu0
    %v182 = vadd.f32 %v108, %v181
    %v183 = vpop.f32.mrf.mxu0
    %184 = vmatprep.mubr.f32.mxu0 %v50
    %185 = vmatmul.mubr.f32.gmra.mxu0 %v49
    %v186 = vpop.f32.mrf.mxu0
    %v187 = vadd.f32 %v108, %v186
    %v188 = vpop.f32.mrf.mxu0
    %189 = vmatprep.mubr.f32.mxu0 %v53
    %190 = vmatmul.mubr.f32.gmra.mxu0 %v52
    %v191 = vpop.f32.mrf.mxu0
    %v192 = vadd.f32 %v108, %v191
    %v193 = vpop.f32.mrf.mxu0
    %194 = vdwg.mxu0
    %195 = vmatprep.subr.mxu0 0.0
    %196 = vmatpush1.msra.mxu0 %v102
    %197 = vmatprep.subr.mxu0 0.0
    %198 = vmatpush1.msra.mxu0 %v101
    %199 = vmatprep.subr.mxu0 0.0
    %200 = vmatpush1.msra.mxu0 %v100
    %201 = vmatprep.subr.mxu0 0.0
    %202 = vmatpush1.msra.mxu0 %v99
    %203 = vmatprep.subr.mxu0 0.0
    %204 = vmatpush1.msra.mxu0 %v98
    %205 = vmatprep.subr.mxu0 0.0
    %206 = vmatpush1.msra.mxu0 %v97
    %207 = vmatprep.subr.mxu0 0.0
    %208 = vmatpush1.msra.mxu0 %v96
    %209 = vmatprep.subr.mxu0 0.0
    %210 = vmatpush1.msra.mxu0 %v95
    %211 = vmatprep.subr.mxu0 0.0
    %212 = vmatpush1.msra.mxu0 %v94
    %213 = vmatprep.subr.mxu0 0.0
    %214 = vmatpush1.msra.mxu0 %v93
    %215 = vmatprep.subr.mxu0 0.0
    %216 = vmatpush1.msra.mxu0 %v92
    %217 = vmatprep.subr.mxu0 0.0
    %218 = vmatpush1.msra.mxu0 %v91
    %219 = vmatprep.subr.mxu0 0.0
    %220 = vmatpush1.msra.mxu0 %v90
    %221 = vmatprep.subr.mxu0 0.0
    %222 = vmatpush1.msra.mxu0 %v89
    %223 = vmatprep.subr.mxu0 0.0
    %224 = vmatpush1.msra.mxu0 %v88
    %225 = vmatprep.subr.mxu0 0.0
    %226 = vmatpush1.msra.mxu0 %v87
    %227 = vmatprep.subr.mxu0 0.0
    %228 = vmatpush2.msra.mxu0 0.0
    %229 = vmatprep.subr.mxu0 0.0
    %230 = vmatpush2.msra.mxu0 0.0
    %231 = vmatprep.subr.mxu0 0.0
    %232 = vmatpush2.msra.mxu0 0.0
    %233 = vmatprep.subr.mxu0 0.0
    %234 = vmatpush2.msra.mxu0 0.0
    %235 = vmatprep.subr.mxu0 0.0
    %236 = vmatpush2.msra.mxu0 0.0
    %237 = vmatprep.subr.mxu0 0.0
    %238 = vmatpush2.msra.mxu0 0.0
    %239 = vmatprep.subr.mxu0 0.0
    %240 = vmatpush2.msra.mxu0 0.0
    %241 = vmatprep.subr.mxu0 0.0
    %242 = vmatpush2.msra.mxu0 0.0
    %243 = vmatprep.subr.mxu0 0.0
    %244 = vmatpush2.msra.mxu0 0.0
    %245 = vmatprep.subr.mxu0 0.0
    %246 = vmatpush2.msra.mxu0 0.0
    %247 = vmatprep.subr.mxu0 0.0
    %248 = vmatpush2.msra.mxu0 0.0
    %249 = vmatprep.subr.mxu0 0.0
    %250 = vmatpush2.msra.mxu0 0.0
    %251 = vmatprep.subr.mxu0 0.0
    %252 = vmatpush2.msra.mxu0 0.0
    %253 = vmatprep.subr.mxu0 0.0
    %254 = vmatpush2.msra.mxu0 0.0
    %255 = vmatprep.subr.mxu0 0.0
    %256 = vmatpush2.msra.mxu0 0.0
    %257 = vmatprep.subr.mxu0 0.0
    %258 = vmatpush2.msra.mxu0 0.0
    %259 = vmatprep.mubr.f32.mxu0 0.0
    %260 = vmatmul.mubr.f32.gmra.mxu0 %v45
    %v261 = vpop.f32.mrf.mxu0
    %v262 = vadd.f32 %v177, %v261
    %v263 = vpop.f32.mrf.mxu0
    %264 = vmatprep.mubr.f32.mxu0 0.0
    %265 = vmatmul.mubr.f32.gmra.mxu0 %v48
    %v266 = vpop.f32.mrf.mxu0
    %v267 = vadd.f32 %v182, %v266
    %v268 = vpop.f32.mrf.mxu0
    %269 = vmatprep.mubr.f32.mxu0 0.0
    %270 = vmatmul.mubr.f32.gmra.mxu0 %v51
    %v271 = vpop.f32.mrf.mxu0
    %v272 = vadd.f32 %v187, %v271
    %v273 = vpop.f32.mrf.mxu0
    %274 = vmatprep.mubr.f32.mxu0 0.0
    %275 = vmatmul.mubr.f32.gmra.mxu0 %v54
    %v276 = vpop.f32.mrf.mxu0
    %v277 = vadd.f32 %v192, %v276
    %v278 = vpop.f32.mrf.mxu0
    %279 = vdwg.mxu0
    %v280 = vmul.f32 %v262, 0.1
    %v281 = vmul.f32 %v267, 0.1
    %v282 = vmul.f32 %v272, 0.1
    %v283 = vmul.f32 %v277, 0.1
    %v284 = vmax.f32 %v262, %v280
    %v285 = vmax.f32 %v267, %v281
    %v286 = vmax.f32 %v272, %v282
    %v287 = vmax.f32 %v277, %v283
    %288 = vst [vmem:[#allocation7] sm:$0xff] %v284
    %289 = vst [vmem:[#allocation7 + $0x8] sm:$0xff] %v285
    %290 = vst [vmem:[#allocation7 + $0x10] sm:$0xff] %v286
    %291 = vst [vmem:[#allocation7 + $0x18] sm:$0xff] %v287
    // Predicated region
    $region22: #{tpu_custom_call.1} parent=1 // pred_check
      _
    $region23: #{tpu_custom_call.1} parent=1 // pred_check_branch
      %293 = sbr.rel (0) target = $region25
    $region24: #{tpu_custom_call.1} parent=1 // pred_region
      %s295 = ssub.s32 512, 512
      %296 = vsyncadd [#allocation4], %s295
      %s297 = sshll.u32 [#allocation7], 4
      %s298 = int_to_ptr.vmem [resolvable:$true] %s297
      %303 = dma.vmem_to_hbm [thread:$0]  %s298, 512, %s3, [#allocation4], 128, 128, 8
    $region25: #{tpu_custom_call.1} parent=1 // pred_fallthru
      _
    // Predicated region
    $region26: #{tpu_custom_call.1} parent=1 // pred_check
      _
    $region27: #{tpu_custom_call.1} parent=1 // pred_check_branch
      %305 = sbr.rel (0) target = $region29
    $region28: #{tpu_custom_call.1} parent=1 // pred_region
      %306 = dma.done [#allocation4], 512
    $region29: #{tpu_custom_call.1} parent=1 // pred_fallthru
      _
    %307 = vsyncpa [#allocation3], 1
    %308 = vsyncpa [#allocation6], 1
    %309 = vsyncpa [#allocation4], 1

</llo_original>
